<compile_context>
chip_gen: v6e
topology: v6e:2x2x1
jax: 0.10.0
libtpu: 0.0.40
codegen_flags: <defaults>
</compile_context>

<pallas_src>
import jax
import jax.numpy as jnp
from jax.experimental import pallas as pl
from jax.experimental.pallas import tpu as pltpu

INPUT_SIZE = 2
HIDDEN_SIZE = 8
OUTPUT_SIZE = 2
N_QUBITS = 2
QDIM = 2 ** N_QUBITS  # 4

# Sublane-aligned row offsets inside the packed (P_ROWS, 128) parameter slab.
R_W1 = 0      # (INPUT_SIZE,  HIDDEN_SIZE)
R_B1 = 8      # (1,           HIDDEN_SIZE)
R_WQ = 16     # (INPUT_SIZE,  QDIM)
R_WEFF = 24   # (HIDDEN_SIZE, OUTPUT_SIZE)   = W2 @ Wf[:H] @ Wo
R_WQEFF = 32  # (QDIM,        OUTPUT_SIZE)   = Wf[H:] @ Wo
R_BEFF = 40   # (1,           OUTPUT_SIZE)   = (b2 @ Wf[:H] + bf) @ Wo + bo
P_ROWS = 48
P_LANES = 128


def hybrid_kernel(x_ref, x0_ref, p_ref, out_ref):
    x = x_ref[...]                                            # (TB, IN)  f32
    x0 = x0_ref[...]                                          # (1, IN)   f32
    tb = x.shape[0]

    # Static slices of the packed parameter slab (sublane-aligned rows).
    w1 = p_ref[R_W1:R_W1 + INPUT_SIZE, 0:HIDDEN_SIZE]             # (2, 8)
    b1 = p_ref[R_B1:R_B1 + 1, 0:HIDDEN_SIZE]                      # (1, 8)
    wq = p_ref[R_WQ:R_WQ + INPUT_SIZE, 0:QDIM]                    # (2, 4)
    w_eff = p_ref[R_WEFF:R_WEFF + HIDDEN_SIZE, 0:OUTPUT_SIZE]     # (8, 2)
    wq_eff = p_ref[R_WQEFF:R_WQEFF + QDIM, 0:OUTPUT_SIZE]         # (4, 2)
    b_eff = p_ref[R_BEFF:R_BEFF + 1, 0:OUTPUT_SIZE]               # (1, 2)

    # ---- classical layer 1: h = ReLU(x @ W1 + b1), unrolled VPU FMAs (K=2) ----
    h = jnp.broadcast_to(b1, (tb, HIDDEN_SIZE))
    for k in range(INPUT_SIZE):
        h = h + x[:, k:k + 1] * w1[k:k + 1, :]
    h = jnp.maximum(h, 0.0)                                   # ReLU

    # ---- quantum surrogate on first sample: q = softmax(x0 @ Wq), (1, QDIM) ----
    ql = jnp.zeros((1, QDIM), jnp.float32)
    for k in range(INPUT_SIZE):
        ql = ql + x0[:, k:k + 1] * wq[k:k + 1, :]
    ql = ql - jnp.max(ql, axis=-1, keepdims=True)
    qe = jnp.exp(ql)
    q = qe * pl.reciprocal(jnp.sum(qe, axis=-1, keepdims=True), approx=False)

    # ---- fold quantum contribution into the collapsed bias (batch-invariant) ----
    bias = b_eff                                              # (1, OUT)
    for k in range(QDIM):
        bias = bias + q[:, k:k + 1] * wq_eff[k:k + 1, :]

    # ---- collapsed affine chain (W2 -> fusion -> output) + sigmoid ----
    o = jnp.broadcast_to(bias, (tb, OUTPUT_SIZE))
    for k in range(HIDDEN_SIZE):
        o = o + h[:, k:k + 1] * w_eff[k:k + 1, :]
    out_ref[...] = jax.nn.sigmoid(o)


def pack_params(raw):
    """Collapse the post-ReLU affine chain and pack everything into one slab."""
    w1, b1, w2, b2, wq, wf, bf, wo, bo = raw
    wf_c = wf[:HIDDEN_SIZE, :]                                # acts on classical part
    wf_q = wf[HIDDEN_SIZE:, :]                                # acts on quantum part
    w_eff = w2 @ wf_c @ wo                                    # (HID, OUT)
    wq_eff = wf_q @ wo                                        # (QDIM, OUT)
    b_eff = (b2 @ wf_c + bf) @ wo + bo                        # (1, OUT)

    slab = jnp.zeros((P_ROWS, P_LANES), jnp.float32)
    slab = slab.at[R_W1:R_W1 + INPUT_SIZE, 0:HIDDEN_SIZE].set(w1)
    slab = slab.at[R_B1:R_B1 + 1, 0:HIDDEN_SIZE].set(b1)
    slab = slab.at[R_WQ:R_WQ + INPUT_SIZE, 0:QDIM].set(wq)
    slab = slab.at[R_WEFF:R_WEFF + HIDDEN_SIZE, 0:OUTPUT_SIZE].set(w_eff)
    slab = slab.at[R_WQEFF:R_WQEFF + QDIM, 0:OUTPUT_SIZE].set(wq_eff)
    slab = slab.at[R_BEFF:R_BEFF + 1, 0:OUTPUT_SIZE].set(b_eff)
    return slab


def _pick_tile(batch: int) -> int:
    """Largest convenient batch tile: whole batch when small, else the biggest
    power-of-two divisor <= 1024 (keeps ~0.35us/step grid overhead negligible
    while staying far inside the VMEM budget)."""
    if batch <= 1024:
        return batch
    for t in (1024, 512, 256, 128, 64, 32, 16, 8):
        if batch % t == 0:
            return t
    return batch


def hybrid_forward(x, packed):
    batch = x.shape[0]
    tile_b = _pick_tile(batch)
    grid = (batch // tile_b,)
    x0 = x[0:1, :]                                            # quantum input row
    return pl.pallas_call(
        hybrid_kernel,
        out_shape=jax.ShapeDtypeStruct((batch, OUTPUT_SIZE), jnp.float32),
        grid=grid,
        in_specs=[
            pl.BlockSpec((tile_b, INPUT_SIZE), lambda i: (i, 0)),
            pl.BlockSpec((1, INPUT_SIZE), lambda i: (0, 0)),
            pl.BlockSpec((P_ROWS, P_LANES), lambda i: (0, 0)),
        ],
        out_specs=pl.BlockSpec((tile_b, OUTPUT_SIZE), lambda i: (i, 0)),
        compiler_params=pltpu.CompilerParams(
            dimension_semantics=("parallel",)),
    )(x, x0, packed)


def init_params(key):
    ks = jax.random.split(key, 5)

    def lin(k, fan_in, fan_out):
        bound = 1.0 / jnp.sqrt(fan_in)
        kw, kb = jax.random.split(k)
        w = jax.random.uniform(kw, (fan_in, fan_out), jnp.float32, -bound, bound)
        b = jax.random.uniform(kb, (1, fan_out), jnp.float32, -bound, bound)
        return w, b

    w1, b1 = lin(ks[0], INPUT_SIZE, HIDDEN_SIZE)              # classical layer 1
    w2, b2 = lin(ks[1], HIDDEN_SIZE, HIDDEN_SIZE)             # classical layer 2
    wq = jax.random.normal(ks[2], (INPUT_SIZE, QDIM), jnp.float32)  # quantum surrogate
    wf, bf = lin(ks[3], HIDDEN_SIZE + QDIM, OUTPUT_SIZE)      # fusion_layer
    wo, bo = lin(ks[4], OUTPUT_SIZE, OUTPUT_SIZE)             # output_layer
    return (w1, b1, w2, b2, wq, wf, bf, wo, bo)


def reference_forward(x, raw):
    """Pure-JAX reference with the ORIGINAL (un-collapsed) layer structure."""
    w1, b1, w2, b2, wq, wf, bf, wo, bo = raw
    h = jnp.maximum(x @ w1 + b1, 0.0)
    classical = h @ w2 + b2
    q = jax.nn.softmax(x[0:1] @ wq, axis=-1)
    q_b = jnp.broadcast_to(q, (x.shape[0], QDIM))
    fused = jnp.concatenate([classical, q_b], axis=1)
    o = fused @ wf + bf
    o = o @ wo + bo
    return jax.nn.sigmoid(o)


if __name__ == "__main__":
    key = jax.random.PRNGKey(0)
    k_x, k_p = jax.random.split(key)

    batch = 4
    x = jax.random.normal(k_x, (batch, INPUT_SIZE), jnp.float32)
    raw_params = init_params(k_p)
    packed = pack_params(raw_params)

    out = hybrid_forward(x, packed)
    out = jax.block_until_ready(out)

    ref = reference_forward(x, raw_params)
    assert out.shape == (batch, OUTPUT_SIZE)
    assert jnp.allclose(out, ref, atol=2e-5, rtol=2e-5), (out, ref)

    print("KERNEL_OK")
</pallas_src>

<mosaic_0001>
module attributes {stable_mosaic.version = 11 : i64} {
  func.func @hybrid_kernel(%arg0: i32, %arg1: memref<4x2xf32, #tpu.memory_space<vmem>>, %arg2: memref<1x2xf32, #tpu.memory_space<vmem>>, %arg3: memref<48x128xf32, #tpu.memory_space<vmem>>, %arg4: memref<4x2xf32, #tpu.memory_space<vmem>>) attributes {dimension_semantics = [#tpu.dimension_semantics<parallel>], iteration_bounds = array<i64: 1>, scalar_prefetch = 0 : i64, scratch_operands = 0 : i64, tpu.core_type = #tpu.core_type<tc>, window_params = [{transform_indices = @transform_0, window_bounds = array<i64: 4, 2>}, {pipeline_mode = #tpu.pipeline_mode<synchronous>, transform_indices = @transform_1, window_bounds = array<i64: 1, 2>}, {pipeline_mode = #tpu.pipeline_mode<synchronous>, transform_indices = @transform_2, window_bounds = array<i64: 48, 128>}, {transform_indices = @transform_3, window_bounds = array<i64: 4, 2>}]} {
    %c0 = arith.constant 0 : index
    %c0_0 = arith.constant 0 : index
    %0 = vector.load %arg1[%c0, %c0_0] : memref<4x2xf32, #tpu.memory_space<vmem>>, vector<4x2xf32>
    %c0_1 = arith.constant 0 : index
    %c0_2 = arith.constant 0 : index
    %1 = vector.load %arg2[%c0_1, %c0_2] : memref<1x2xf32, #tpu.memory_space<vmem>>, vector<1x2xf32>
    %c0_3 = arith.constant 0 : index
    %c0_4 = arith.constant 0 : index
    %2 = vector.load %arg3[%c0_3, %c0_4] : memref<48x128xf32, #tpu.memory_space<vmem>>, vector<2x8xf32>
    %c8 = arith.constant 8 : index
    %c0_5 = arith.constant 0 : index
    %3 = vector.load %arg3[%c8, %c0_5] : memref<48x128xf32, #tpu.memory_space<vmem>>, vector<1x8xf32>
    %c16 = arith.constant 16 : index
    %c0_6 = arith.constant 0 : index
    %4 = vector.load %arg3[%c16, %c0_6] : memref<48x128xf32, #tpu.memory_space<vmem>>, vector<2x4xf32>
    %c24 = arith.constant 24 : index
    %c0_7 = arith.constant 0 : index
    %5 = vector.load %arg3[%c24, %c0_7] : memref<48x128xf32, #tpu.memory_space<vmem>>, vector<8x2xf32>
    %c32 = arith.constant 32 : index
    %c0_8 = arith.constant 0 : index
    %6 = vector.load %arg3[%c32, %c0_8] : memref<48x128xf32, #tpu.memory_space<vmem>>, vector<4x2xf32>
    %c40 = arith.constant 40 : index
    %c0_9 = arith.constant 0 : index
    %7 = vector.load %arg3[%c40, %c0_9] : memref<48x128xf32, #tpu.memory_space<vmem>>, vector<1x2xf32>
    %8 = vector.shape_cast %3 : vector<1x8xf32> to vector<1x8xf32>
    %9 = vector.broadcast %8 : vector<1x8xf32> to vector<4x8xf32>
    %10 = vector.extract_strided_slice %0 {offsets = [0, 0], sizes = [4, 1], strides = [1, 1]} : vector<4x2xf32> to vector<4x1xf32>
    %11 = vector.extract_strided_slice %2 {offsets = [0, 0], sizes = [1, 8], strides = [1, 1]} : vector<2x8xf32> to vector<1x8xf32>
    %12 = vector.broadcast %10 : vector<4x1xf32> to vector<4x8xf32>
    %13 = vector.broadcast %11 : vector<1x8xf32> to vector<4x8xf32>
    %14 = arith.mulf %12, %13 : vector<4x8xf32>
    %15 = arith.addf %9, %14 : vector<4x8xf32>
    %16 = vector.extract_strided_slice %0 {offsets = [0, 1], sizes = [4, 1], strides = [1, 1]} : vector<4x2xf32> to vector<4x1xf32>
    %17 = vector.extract_strided_slice %2 {offsets = [1, 0], sizes = [1, 8], strides = [1, 1]} : vector<2x8xf32> to vector<1x8xf32>
    %18 = vector.broadcast %16 : vector<4x1xf32> to vector<4x8xf32>
    %19 = vector.broadcast %17 : vector<1x8xf32> to vector<4x8xf32>
    %20 = arith.mulf %18, %19 : vector<4x8xf32>
    %21 = arith.addf %15, %20 : vector<4x8xf32>
    %cst = arith.constant 0.000000e+00 : f32
    %22 = vector.broadcast %cst : f32 to vector<4x8xf32>
    %23 = arith.maximumf %21, %22 : vector<4x8xf32>
    %cst_10 = arith.constant 0.000000e+00 : f32
    %24 = vector.broadcast %cst_10 : f32 to vector<1x4xf32>
    %25 = vector.extract_strided_slice %1 {offsets = [0, 0], sizes = [1, 1], strides = [1, 1]} : vector<1x2xf32> to vector<1x1xf32>
    %26 = vector.extract_strided_slice %4 {offsets = [0, 0], sizes = [1, 4], strides = [1, 1]} : vector<2x4xf32> to vector<1x4xf32>
    %27 = vector.broadcast %25 : vector<1x1xf32> to vector<1x4xf32>
    %28 = arith.mulf %27, %26 : vector<1x4xf32>
    %29 = arith.addf %24, %28 : vector<1x4xf32>
    %30 = vector.extract_strided_slice %1 {offsets = [0, 1], sizes = [1, 1], strides = [1, 1]} : vector<1x2xf32> to vector<1x1xf32>
    %31 = vector.extract_strided_slice %4 {offsets = [1, 0], sizes = [1, 4], strides = [1, 1]} : vector<2x4xf32> to vector<1x4xf32>
    %32 = vector.broadcast %30 : vector<1x1xf32> to vector<1x4xf32>
    %33 = arith.mulf %32, %31 : vector<1x4xf32>
    %34 = arith.addf %29, %33 : vector<1x4xf32>
    %cst_11 = arith.constant dense<0xFF800000> : vector<1xf32>
    %35 = vector.multi_reduction <maximumf>, %34, %cst_11 [1] : vector<1x4xf32> to vector<1xf32>
    %36 = vector.shape_cast %35 : vector<1xf32> to vector<1x1xf32>
    %37 = vector.broadcast %36 : vector<1x1xf32> to vector<1x4xf32>
    %38 = arith.subf %34, %37 : vector<1x4xf32>
    %39 = math.exp %38 : vector<1x4xf32>
    %cst_12 = arith.constant dense<0.000000e+00> : vector<1xf32>
    %40 = vector.multi_reduction <add>, %39, %cst_12 [1] : vector<1x4xf32> to vector<1xf32>
    %41 = vector.shape_cast %40 : vector<1xf32> to vector<1x1xf32>
    %42 = tpu.reciprocal %41 : vector<1x1xf32> -> vector<1x1xf32>
    %43 = vector.broadcast %42 : vector<1x1xf32> to vector<1x4xf32>
    %44 = arith.mulf %39, %43 : vector<1x4xf32>
    %45 = vector.extract_strided_slice %44 {offsets = [0, 0], sizes = [1, 1], strides = [1, 1]} : vector<1x4xf32> to vector<1x1xf32>
    %46 = vector.extract_strided_slice %6 {offsets = [0, 0], sizes = [1, 2], strides = [1, 1]} : vector<4x2xf32> to vector<1x2xf32>
    %47 = vector.broadcast %45 : vector<1x1xf32> to vector<1x2xf32>
    %48 = arith.mulf %47, %46 : vector<1x2xf32>
    %49 = arith.addf %7, %48 : vector<1x2xf32>
    %50 = vector.extract_strided_slice %44 {offsets = [0, 1], sizes = [1, 1], strides = [1, 1]} : vector<1x4xf32> to vector<1x1xf32>
    %51 = vector.extract_strided_slice %6 {offsets = [1, 0], sizes = [1, 2], strides = [1, 1]} : vector<4x2xf32> to vector<1x2xf32>
    %52 = vector.broadcast %50 : vector<1x1xf32> to vector<1x2xf32>
    %53 = arith.mulf %52, %51 : vector<1x2xf32>
    %54 = arith.addf %49, %53 : vector<1x2xf32>
    %55 = vector.extract_strided_slice %44 {offsets = [0, 2], sizes = [1, 1], strides = [1, 1]} : vector<1x4xf32> to vector<1x1xf32>
    %56 = vector.extract_strided_slice %6 {offsets = [2, 0], sizes = [1, 2], strides = [1, 1]} : vector<4x2xf32> to vector<1x2xf32>
    %57 = vector.broadcast %55 : vector<1x1xf32> to vector<1x2xf32>
    %58 = arith.mulf %57, %56 : vector<1x2xf32>
    %59 = arith.addf %54, %58 : vector<1x2xf32>
    %60 = vector.extract_strided_slice %44 {offsets = [0, 3], sizes = [1, 1], strides = [1, 1]} : vector<1x4xf32> to vector<1x1xf32>
    %61 = vector.extract_strided_slice %6 {offsets = [3, 0], sizes = [1, 2], strides = [1, 1]} : vector<4x2xf32> to vector<1x2xf32>
    %62 = vector.broadcast %60 : vector<1x1xf32> to vector<1x2xf32>
    %63 = arith.mulf %62, %61 : vector<1x2xf32>
    %64 = arith.addf %59, %63 : vector<1x2xf32>
    %65 = vector.shape_cast %64 : vector<1x2xf32> to vector<1x2xf32>
    %66 = vector.broadcast %65 : vector<1x2xf32> to vector<4x2xf32>
    %67 = vector.extract_strided_slice %23 {offsets = [0, 0], sizes = [4, 1], strides = [1, 1]} : vector<4x8xf32> to vector<4x1xf32>
    %68 = vector.extract_strided_slice %5 {offsets = [0, 0], sizes = [1, 2], strides = [1, 1]} : vector<8x2xf32> to vector<1x2xf32>
    %69 = vector.broadcast %67 : vector<4x1xf32> to vector<4x2xf32>
    %70 = vector.broadcast %68 : vector<1x2xf32> to vector<4x2xf32>
    %71 = arith.mulf %69, %70 : vector<4x2xf32>
    %72 = arith.addf %66, %71 : vector<4x2xf32>
    %73 = vector.extract_strided_slice %23 {offsets = [0, 1], sizes = [4, 1], strides = [1, 1]} : vector<4x8xf32> to vector<4x1xf32>
    %74 = vector.extract_strided_slice %5 {offsets = [1, 0], sizes = [1, 2], strides = [1, 1]} : vector<8x2xf32> to vector<1x2xf32>
    %75 = vector.broadcast %73 : vector<4x1xf32> to vector<4x2xf32>
    %76 = vector.broadcast %74 : vector<1x2xf32> to vector<4x2xf32>
    %77 = arith.mulf %75, %76 : vector<4x2xf32>
    %78 = arith.addf %72, %77 : vector<4x2xf32>
    %79 = vector.extract_strided_slice %23 {offsets = [0, 2], sizes = [4, 1], strides = [1, 1]} : vector<4x8xf32> to vector<4x1xf32>
    %80 = vector.extract_strided_slice %5 {offsets = [2, 0], sizes = [1, 2], strides = [1, 1]} : vector<8x2xf32> to vector<1x2xf32>
    %81 = vector.broadcast %79 : vector<4x1xf32> to vector<4x2xf32>
    %82 = vector.broadcast %80 : vector<1x2xf32> to vector<4x2xf32>
    %83 = arith.mulf %81, %82 : vector<4x2xf32>
    %84 = arith.addf %78, %83 : vector<4x2xf32>
    %85 = vector.extract_strided_slice %23 {offsets = [0, 3], sizes = [4, 1], strides = [1, 1]} : vector<4x8xf32> to vector<4x1xf32>
    %86 = vector.extract_strided_slice %5 {offsets = [3, 0], sizes = [1, 2], strides = [1, 1]} : vector<8x2xf32> to vector<1x2xf32>
    %87 = vector.broadcast %85 : vector<4x1xf32> to vector<4x2xf32>
    %88 = vector.broadcast %86 : vector<1x2xf32> to vector<4x2xf32>
    %89 = arith.mulf %87, %88 : vector<4x2xf32>
    %90 = arith.addf %84, %89 : vector<4x2xf32>
    %91 = vector.extract_strided_slice %23 {offsets = [0, 4], sizes = [4, 1], strides = [1, 1]} : vector<4x8xf32> to vector<4x1xf32>
    %92 = vector.extract_strided_slice %5 {offsets = [4, 0], sizes = [1, 2], strides = [1, 1]} : vector<8x2xf32> to vector<1x2xf32>
    %93 = vector.broadcast %91 : vector<4x1xf32> to vector<4x2xf32>
    %94 = vector.broadcast %92 : vector<1x2xf32> to vector<4x2xf32>
    %95 = arith.mulf %93, %94 : vector<4x2xf32>
    %96 = arith.addf %90, %95 : vector<4x2xf32>
    %97 = vector.extract_strided_slice %23 {offsets = [0, 5], sizes = [4, 1], strides = [1, 1]} : vector<4x8xf32> to vector<4x1xf32>
    %98 = vector.extract_strided_slice %5 {offsets = [5, 0], sizes = [1, 2], strides = [1, 1]} : vector<8x2xf32> to vector<1x2xf32>
    %99 = vector.broadcast %97 : vector<4x1xf32> to vector<4x2xf32>
    %100 = vector.broadcast %98 : vector<1x2xf32> to vector<4x2xf32>
    %101 = arith.mulf %99, %100 : vector<4x2xf32>
    %102 = arith.addf %96, %101 : vector<4x2xf32>
    %103 = vector.extract_strided_slice %23 {offsets = [0, 6], sizes = [4, 1], strides = [1, 1]} : vector<4x8xf32> to vector<4x1xf32>
    %104 = vector.extract_strided_slice %5 {offsets = [6, 0], sizes = [1, 2], strides = [1, 1]} : vector<8x2xf32> to vector<1x2xf32>
    %105 = vector.broadcast %103 : vector<4x1xf32> to vector<4x2xf32>
    %106 = vector.broadcast %104 : vector<1x2xf32> to vector<4x2xf32>
    %107 = arith.mulf %105, %106 : vector<4x2xf32>
    %108 = arith.addf %102, %107 : vector<4x2xf32>
    %109 = vector.extract_strided_slice %23 {offsets = [0, 7], sizes = [4, 1], strides = [1, 1]} : vector<4x8xf32> to vector<4x1xf32>
    %110 = vector.extract_strided_slice %5 {offsets = [7, 0], sizes = [1, 2], strides = [1, 1]} : vector<8x2xf32> to vector<1x2xf32>
    %111 = vector.broadcast %109 : vector<4x1xf32> to vector<4x2xf32>
    %112 = vector.broadcast %110 : vector<1x2xf32> to vector<4x2xf32>
    %113 = arith.mulf %111, %112 : vector<4x2xf32>
    %114 = arith.addf %108, %113 : vector<4x2xf32>
    %115 = arith.negf %114 : vector<4x2xf32>
    %116 = math.exp %115 : vector<4x2xf32>
    %cst_13 = arith.constant 1.000000e+00 : f32
    %117 = vector.broadcast %cst_13 : f32 to vector<4x2xf32>
    %118 = arith.addf %117, %116 : vector<4x2xf32>
    %119 = arith.divf %117, %118 : vector<4x2xf32>
    %c0_14 = arith.constant 0 : index
    %c0_15 = arith.constant 0 : index
    %120 = vector.load %arg4[%c0_14, %c0_15] : memref<4x2xf32, #tpu.memory_space<vmem>>, vector<4x2xf32>
    tpu.vector_store %arg4[%c0_14, %c0_15], %119 {strides = array<i32>} : memref<4x2xf32, #tpu.memory_space<vmem>>, vector<4x2xf32>,
    return
  }
  func.func @transform_0(%arg0: i32) -> (i32, i32) {
    %c0_i32 = arith.constant 0 : i32
    %c0_i32_0 = arith.constant 0 : i32
    return %arg0, %c0_i32 : i32, i32
  }
  func.func @transform_1(%arg0: i32) -> (i32, i32) {
    %c0_i32 = arith.constant 0 : i32
    %c0_i32_0 = arith.constant 0 : i32
    %c0_i32_1 = arith.constant 0 : i32
    return %c0_i32, %c0_i32_0 : i32, i32
  }
  func.func @transform_2(%arg0: i32) -> (i32, i32) {
    %c0_i32 = arith.constant 0 : i32
    %c0_i32_0 = arith.constant 0 : i32
    %c0_i32_1 = arith.constant 0 : i32
    return %c0_i32, %c0_i32_0 : i32, i32
  }
  func.func @transform_3(%arg0: i32) -> (i32, i32) {
    %c0_i32 = arith.constant 0 : i32
    %c0_i32_0 = arith.constant 0 : i32
    return %arg0, %c0_i32 : i32, i32
  }
}

</mosaic_0001>

<llo_original>
// kernel: tpu_custom_call.1
$region0: #{tpu_custom_call.1}
  #allocation0 [shape = 'u32[]', space=smem, size = 0x4, offset = 0x4, fixed_abs, tag = 'smem constant byte address 0x4 - core index']
  #allocation1 [shape = 'u32[144,128]{1,0:T(1,128)}', space=vmem, size = 0x12000, scoped, tag = 'internal scratch']
  %s0 = inlined_call_operand.vmem [shape: f32[4,2], index: 0, kind: input, shape index: {}]
  %s1 = inlined_call_operand.vmem [shape: f32[1,2], index: 1, kind: input, shape index: {}]
  %s2 = inlined_call_operand.hbm [shape: f32[48,128], index: 2, kind: input, shape index: {}]
  %s3 = inlined_call_operand.vmem [shape: f32[4,2], index: 3, kind: output, shape index: {}]
  %s4 = sld [smem:[#allocation0]]
  $region26: #{tpu_custom_call.1} parent=0
    _
  %s6 = ssub.s32 1, %s4
  %s7 = scalar_select 0, %s6, %s4
  $region1: #{tpu_custom_call.1} parent=0
    #allocation2 [shape = 'u8[24576]{0}', space=vmem, size = 0x6000, scoped, tag = 'input window, operand 2, single buffered']
    #allocation3 [shape = 's32[1]{0}', space=sflag, size = 0x4, scoped, tag = 'scoped memory for tpu_custom_call.1']
    %8 = vsyncpa [#allocation3], 0
    // Predicated region
    $region2: #{tpu_custom_call.1} parent=1 // pred_check
      _
    $region3: #{tpu_custom_call.1} parent=1 // pred_check_branch
      %10 = sbr.rel (0) target = $region5
    $region4: #{tpu_custom_call.1} parent=1 // pred_region
      _
    $region5: #{tpu_custom_call.1} parent=1 // pred_fallthru
      _
    // Predicated region
    $region6: #{tpu_custom_call.1} parent=1 // pred_check
      _
    $region7: #{tpu_custom_call.1} parent=1 // pred_check_branch
      %12 = sbr.rel (0) target = $region9
    $region8: #{tpu_custom_call.1} parent=1 // pred_region
      _
    $region9: #{tpu_custom_call.1} parent=1 // pred_fallthru
      _
    // Predicated region
    $region10: #{tpu_custom_call.1} parent=1 // pred_check
      _
    $region11: #{tpu_custom_call.1} parent=1 // pred_check_branch
      %14 = sbr.rel (0) target = $region13
    $region12: #{tpu_custom_call.1} parent=1 // pred_region
      %s16 = ssub.s32 768, 768
      %17 = vsyncadd [#allocation3], %s16
      %s18 = sshll.u32 [#allocation2], 4
      %s19 = int_to_ptr.vmem [resolvable:$true] %s18
      %24 = dma.hbm_to_vmem [thread:$0]  %s2, 768, %s19, [#allocation3], 128, 128, 8
    $region13: #{tpu_custom_call.1} parent=1 // pred_fallthru
      _
    // Predicated region
    $region14: #{tpu_custom_call.1} parent=1 // pred_check
      _
    $region15: #{tpu_custom_call.1} parent=1 // pred_check_branch
      %26 = sbr.rel (0) target = $region17
    $region16: #{tpu_custom_call.1} parent=1 // pred_region
      %27 = dma.done [#allocation3], 768
    $region17: #{tpu_custom_call.1} parent=1 // pred_fallthru
      _
    %v28 = vld [vmem:[%s0] sm:$0xf]
    %v29 = vld [vmem:[%s1] sm:$0x1]
    %v30 = vld [vmem:[#allocation2] sm:$0x3]
    %v31 = vld [vmem:[#allocation2 + $0x8] sm:$0x1]
    %v32 = vld [vmem:[#allocation2 + $0x10] sm:$0x3]
    %v33 = vld [vmem:[#allocation2 + $0x18] sm:$0xff]
    %v34 = vld [vmem:[#allocation2 + $0x20] sm:$0xf]
    %v35 = vld [vmem:[#allocation2 + $0x28] sm:$0x1]
    %v36 = vlaneseq
    %v37 = vshrl.u32 %v36, 7
    %v38 = vsub.s32 0, %v37
    %v39 = vrot.slane %v31, %v38
    %41 = vset.pattern.permute.xlu0 0
    %42 = vperm.xlu0 %41, %v28
    %v43 = vpop.permute.xlu0 %42
    %v45 = vlaneseq
    %v46 = vshrl.u32 %v45, 7
    %v47 = vsub.s32 0, %v46
    %v48 = vrot.slane %v30, %v47
    %v49 = vmul.f32 %v43, %v48
    %v50 = vadd.f32 %v39, %v49
    %51 = vset.pattern.permute.xlu0 1
    %52 = vperm.xlu0 %51, %v28
    %v53 = vpop.permute.xlu0 %52
    %v55 = vlaneseq
    %v56 = vshrl.u32 %v55, 7
    %v57 = vsub.s32 1, %v56
    %v58 = vrot.slane %v30, %v57
    %v59 = vmul.f32 %v53, %v58
    %v60 = vadd.f32 %v50, %v59
    %v61 = vmax.f32 %v60, 0.0
    %63 = vset.pattern.permute.xlu0 0
    %64 = vperm.xlu0 %63, %v29
    %v65 = vpop.permute.xlu0 %64
    %v67 = vlaneseq
    %v68 = vshrl.u32 %v67, 7
    %v69 = vsub.s32 0, %v68
    %v70 = vrot.slane %v65, %v69
    %v71 = vmul.f32 %v70, %v32
    %v72 = vadd.f32 %v71, 0.0
    %73 = vset.pattern.permute.xlu0 1
    %74 = vperm.xlu0 %73, %v29
    %v75 = vpop.permute.xlu0 %74
    %v77 = vlaneseq
    %v78 = vshrl.u32 %v77, 7
    %v79 = vsub.s32 0, %v78
    %v80 = vrot.slane %v75, %v79
    %v81 = vmul.f32 %v80, %v32
    %v83 = vrot.slane %v81, 1
    %v85 = vadd.f32 %v72, %v83
    %vm86 = vcmask 24576
    %v87 = vsel %vm86, %v85, -inf
    %88 = vmax.xlane.f32.xlu0 %v87
    %v89 = vpop.xlane.xlu0 %88
    %v90 = vsub.f32 %v85, %v89
    %v91 = vmul.f32 %v90, 1.442695
    %v92 = vpow.pop %v91
    %v93 = vsel %vm86, %v92, 0.0
    %94 = vadd.xlane.f32.xlu0 %v93
    %v95 = vpop.xlane.xlu0 %94
    %v96 = vrcp.pop %v95
    %v97 = vmul.f32 %v92, %v96
    %99 = vset.pattern.permute.xlu0 0
    %100 = vperm.xlu0 %99, %v97
    %v101 = vpop.permute.xlu0 %100
    %v103 = vmul.f32 %v101, %v34
    %v104 = vadd.f32 %v35, %v103
    %105 = vset.pattern.permute.xlu0 1
    %106 = vperm.xlu0 %105, %v97
    %v107 = vpop.permute.xlu0 %106
    %v110 = vrot.slane %v34, 1
    %v112 = vmul.f32 %v107, %v110
    %v113 = vadd.f32 %v104, %v112
    %114 = vset.pattern.permute.xlu0 2
    %115 = vperm.xlu0 %114, %v97
    %v116 = vpop.permute.xlu0 %115
    %v118 = vrot.slane %v34, 2
    %v120 = vmul.f32 %v116, %v118
    %v121 = vadd.f32 %v113, %v120
    %122 = vset.pattern.permute.xlu0 3
    %123 = vperm.xlu0 %122, %v97
    %v124 = vpop.permute.xlu0 %123
    %v126 = vrot.slane %v34, 3
    %v128 = vmul.f32 %v124, %v126
    %v129 = vadd.f32 %v121, %v128
    %v130 = vlaneseq
    %v131 = vshrl.u32 %v130, 7
    %v132 = vsub.s32 0, %v131
    %v133 = vrot.slane %v129, %v132
    %135 = vset.pattern.permute.xlu0 0
    %136 = vperm.xlu0 %135, %v61
    %v137 = vpop.permute.xlu0 %136
    %v139 = vlaneseq
    %v140 = vshrl.u32 %v139, 7
    %v141 = vsub.s32 0, %v140
    %v142 = vrot.slane %v33, %v141
    %v143 = vmul.f32 %v137, %v142
    %v144 = vadd.f32 %v133, %v143
    %145 = vset.pattern.permute.xlu0 1
    %146 = vperm.xlu0 %145, %v61
    %v147 = vpop.permute.xlu0 %146
    %v149 = vlaneseq
    %v150 = vshrl.u32 %v149, 7
    %v151 = vsub.s32 1, %v150
    %v152 = vrot.slane %v33, %v151
    %v153 = vmul.f32 %v147, %v152
    %v154 = vadd.f32 %v144, %v153
    %155 = vset.pattern.permute.xlu0 2
    %156 = vperm.xlu0 %155, %v61
    %v157 = vpop.permute.xlu0 %156
    %v159 = vlaneseq
    %v160 = vshrl.u32 %v159, 7
    %v161 = vsub.s32 2, %v160
    %v162 = vrot.slane %v33, %v161
    %v163 = vmul.f32 %v157, %v162
    %v164 = vadd.f32 %v154, %v163
    %165 = vset.pattern.permute.xlu0 3
    %166 = vperm.xlu0 %165, %v61
    %v167 = vpop.permute.xlu0 %166
    %v169 = vlaneseq
    %v170 = vshrl.u32 %v169, 7
    %v171 = vsub.s32 3, %v170
    %v172 = vrot.slane %v33, %v171
    %v173 = vmul.f32 %v167, %v172
    %v174 = vadd.f32 %v164, %v173
    %175 = vset.pattern.permute.xlu0 4
    %176 = vperm.xlu0 %175, %v61
    %v177 = vpop.permute.xlu0 %176
    %v179 = vlaneseq
    %v180 = vshrl.u32 %v179, 7
    %v181 = vsub.s32 4, %v180
    %v182 = vrot.slane %v33, %v181
    %v183 = vmul.f32 %v177, %v182
    %v184 = vadd.f32 %v174, %v183
    %185 = vset.pattern.permute.xlu0 5
    %186 = vperm.xlu0 %185, %v61
    %v187 = vpop.permute.xlu0 %186
    %v189 = vlaneseq
    %v190 = vshrl.u32 %v189, 7
    %v191 = vsub.s32 5, %v190
    %v192 = vrot.slane %v33, %v191
    %v193 = vmul.f32 %v187, %v192
    %v194 = vadd.f32 %v184, %v193
    %195 = vset.pattern.permute.xlu0 6
    %196 = vperm.xlu0 %195, %v61
    %v197 = vpop.permute.xlu0 %196
    %v199 = vlaneseq
    %v200 = vshrl.u32 %v199, 7
    %v201 = vsub.s32 6, %v200
    %v202 = vrot.slane %v33, %v201
    %v203 = vmul.f32 %v197, %v202
    %v204 = vadd.f32 %v194, %v203
    %205 = vset.pattern.permute.xlu0 7
    %206 = vperm.xlu0 %205, %v61
    %v207 = vpop.permute.xlu0 %206
    %v209 = vlaneseq
    %v210 = vshrl.u32 %v209, 7
    %v211 = vsub.s32 7, %v210
    %v212 = vrot.slane %v33, %v211
    %v213 = vmul.f32 %v207, %v212
    %v214 = vadd.f32 %v204, %v213
    %v215 = vxor.u32 %v214, 2147483648
    %v216 = vmul.f32 %v215, 1.442695
    %v217 = vpow.pop %v216
    %v218 = vadd.f32 %v217, 1.0
    %v219 = vrcp.pop %v218
    %v220 = vmul.f32 1.0, %v219
    %vm221 = vcmask 11264
    %222 = vst.msk [vmem:[%s3] sm:$0xf] %vm221, %v220
    // Predicated region
    $region18: #{tpu_custom_call.1} parent=1 // pred_check
      _
    $region19: #{tpu_custom_call.1} parent=1 // pred_check_branch
      %224 = sbr.rel (0) target = $region21
    $region20: #{tpu_custom_call.1} parent=1 // pred_region
      _
    $region21: #{tpu_custom_call.1} parent=1 // pred_fallthru
      _
    // Predicated region
    $region22: #{tpu_custom_call.1} parent=1 // pred_check
      _
    $region23: #{tpu_custom_call.1} parent=1 // pred_check_branch
      %226 = sbr.rel (0) target = $region25
    $region24: #{tpu_custom_call.1} parent=1 // pred_region
      _
    $region25: #{tpu_custom_call.1} parent=1 // pred_fallthru
      _
    %227 = vsyncpa [#allocation3], 1

</llo_original>
